<compile_context>
chip_gen: v5e
topology: v5e:2x2
jax: 0.10.0
libtpu: 0.0.40
codegen_flags: <defaults>
</compile_context>

<pallas_src>
import functools

import jax
import jax.numpy as jnp
from jax import lax
from jax.experimental import pallas as pl
from jax.experimental.pallas import tpu as pltpu


# ----------------------------- Pallas kernel ------------------------------ #
def _conv_gemm_kernel(p_ref, w_ref, b_ref, o_ref, *, negative_slope, transpose_out):
    """One (batch, M-tile) step: fused im2col-GEMM + bias + LeakyReLU.

    p_ref: (1, tile_m, K)   im2col patches (K = KH*KW*Cin, lane-dense)
    w_ref: (K, Cout)        folded weight matrix
    b_ref: (1, Cout)        bias, f32
    o_ref: (1, Cout, tile_m) if transpose_out else (1, tile_m, Cout)
    """
    # Single deep-K MXU matmul, f32 accumulation in the MXU result path.
    acc = jnp.dot(p_ref[0], w_ref[...], preferred_element_type=jnp.float32)
    acc = acc + b_ref[...]                                  # (tile_m, Cout)
    acc = jnp.where(acc > 0, acc, negative_slope * acc)     # LeakyReLU(0.2)
    if transpose_out:
        # Small Cout: per-tile transpose so the store is lane-dense (pixels in lanes).
        o_ref[0] = acc.T.astype(o_ref.dtype)                # (Cout, tile_m)
    else:
        # Cout >= 128: already lane-dense, store directly (no XLU transpose).
        o_ref[0] = acc.astype(o_ref.dtype)                  # (tile_m, Cout)


# ------------------------------ helpers ------------------------------------ #
def _rup(v, m):
    return ((v + m - 1) // m) * m


def _choose_tile_m(M):
    """Pick an M tile: full M when tiny, else a multiple of 128 (pad M if needed)."""
    if M < 256:
        return M, M                       # block dim == full array dim (demo case)
    for t in (512, 384, 256, 128):
        if M % t == 0:
            return t, M
    t = 512 if M > 512 else 256
    return t, _rup(M, t)


def _vmem_ceiling_bytes():
    ceiling = 64 << 20                    # conservative default (v7x: 64 MiB / TC)
    try:
        info = pltpu.get_tpu_info()
        cap = getattr(info, "vmem_capacity_bytes", None)
        if cap:
            ceiling = max(int(cap) - (16 << 20), 32 << 20)
    except Exception:
        pass
    return ceiling


# ------------------------------- wrapper ----------------------------------- #
def conv_block_pallas(x, weight, bias, *, stride=2, padding=1,
                      negative_slope=0.2, compute_dtype=jnp.bfloat16):
    """Conv2d(KHxKW, stride, padding, bias) + LeakyReLU.  x: [N, Cin, H, W]."""
    N, Cin, H, W = x.shape
    Cout, Cin_w, KH, KW = weight.shape
    assert Cin == Cin_w

    Ho = (H + 2 * padding - KH) // stride + 1
    Wo = (W + 2 * padding - KW) // stride + 1
    M = Ho * Wo
    K = KH * KW * Cin
    tile_m, Mp = _choose_tile_m(M)
    transpose_out = Cout < 128

    # ---- wrapper-side im2col (blessed for small Cin): one strided gather ----
    xp = jnp.pad(x, ((0, 0), (0, 0), (padding, padding), (padding, padding)))
    taps = []
    for kh in range(KH):
        for kw in range(KW):
            taps.append(xp[:, :,
                           kh:kh + stride * (Ho - 1) + 1:stride,
                           kw:kw + stride * (Wo - 1) + 1:stride])   # (N,Cin,Ho,Wo)
    patches = jnp.stack(taps, axis=1)                                # (N,16,Cin,Ho,Wo)
    patches = patches.transpose(0, 3, 4, 1, 2).reshape(N, M, K)      # k=(kh*KW+kw)*Cin+c
    if Mp != M:
        patches = jnp.pad(patches, ((0, 0), (0, Mp - M), (0, 0)))
    patches = patches.astype(compute_dtype)

    # folded weight matrix: w_mat[(kh*KW+kw)*Cin + c, cout] = weight[cout, c, kh, kw]
    w_mat = weight.transpose(2, 3, 1, 0).reshape(K, Cout).astype(compute_dtype)
    b2 = bias.reshape(1, Cout).astype(jnp.float32)

    # ---- VMEM budget from PADDED footprint, per-generation ceiling ----
    csize = jnp.dtype(compute_dtype).itemsize
    osize = jnp.dtype(x.dtype).itemsize
    in_tile = _rup(tile_m, 8) * _rup(K, 128) * csize
    w_bytes = _rup(K, 8) * _rup(Cout, 128) * csize
    b_bytes = 8 * _rup(Cout, 128) * 4
    if transpose_out:
        out_tile = _rup(Cout, 8) * _rup(tile_m, 128) * osize
    else:
        out_tile = _rup(tile_m, 8) * _rup(Cout, 128) * osize
    needed = 2 * (in_tile + out_tile) + 2 * (w_bytes + b_bytes) + (8 << 20)
    vmem_limit = int(max(min(needed, _vmem_ceiling_bytes()), 16 << 20))

    cost = pl.CostEstimate(
        flops=int(2 * N * Mp * K * Cout),
        transcendentals=0,
        bytes_accessed=int(patches.size * csize + w_mat.size * csize
                           + bias.size * 4 + N * Mp * Cout * osize))

    kernel = functools.partial(_conv_gemm_kernel,
                               negative_slope=negative_slope,
                               transpose_out=transpose_out)

    if transpose_out:
        out_shape = jax.ShapeDtypeStruct((N, Cout, Mp), x.dtype)
        out_spec = pl.BlockSpec((1, Cout, tile_m), lambda n, m: (n, 0, m))
    else:
        out_shape = jax.ShapeDtypeStruct((N, Mp, Cout), x.dtype)
        out_spec = pl.BlockSpec((1, tile_m, Cout), lambda n, m: (n, m, 0))

    out = pl.pallas_call(
        kernel,
        out_shape=out_shape,
        grid_spec=pltpu.PrefetchScalarGridSpec(
            num_scalar_prefetch=0,
            grid=(N, Mp // tile_m),
            in_specs=[
                pl.BlockSpec((1, tile_m, K), lambda n, m: (n, m, 0)),
                pl.BlockSpec((K, Cout), lambda n, m: (0, 0)),
                pl.BlockSpec((1, Cout), lambda n, m: (0, 0)),
            ],
            out_specs=out_spec,
        ),
        compiler_params=pltpu.CompilerParams(
            dimension_semantics=("parallel", "parallel"),
            vmem_limit_bytes=vmem_limit),
        cost_estimate=cost,
    )(patches, w_mat, b2)

    if transpose_out:
        # (N, Cout, Mp) -> NCHW; slice padded pixels (no-op when Mp == M), free reshape.
        if Mp != M:
            out = out[:, :, :M]
        return out.reshape(N, Cout, Ho, Wo)
    else:
        # Channels-last store for big Cout; single NHWC->NCHW transpose outside.
        if Mp != M:
            out = out[:, :M, :]
        return out.reshape(N, Ho, Wo, Cout).transpose(0, 3, 1, 2)


# ------------------------- parameter initialization ------------------------ #
def init_params(key, in_size, out_size, kernel_size=4):
    kw, kb = jax.random.split(key)
    fan_in = in_size * kernel_size * kernel_size
    fan_out = out_size * kernel_size * kernel_size
    # xavier_uniform_ (as in the PyTorch module __init__)
    limit = jnp.sqrt(6.0 / (fan_in + fan_out))
    weight = jax.random.uniform(kw, (out_size, in_size, kernel_size, kernel_size),
                                minval=-limit, maxval=limit, dtype=jnp.float32)
    # PyTorch Conv2d default bias init: U(-1/sqrt(fan_in), 1/sqrt(fan_in))
    blim = 1.0 / jnp.sqrt(fan_in)
    bias = jax.random.uniform(kb, (out_size,), minval=-blim, maxval=blim,
                              dtype=jnp.float32)
    return weight, bias


# ------------------------------ reference ---------------------------------- #
def conv_block_reference(x, weight, bias, *, stride=2, padding=1, negative_slope=0.2):
    y = lax.conv_general_dilated(
        x, weight, window_strides=(stride, stride),
        padding=((padding, padding), (padding, padding)),
        dimension_numbers=("NCHW", "OIHW", "NCHW"))
    y = y + bias[None, :, None, None]
    return jnp.where(y > 0, y, negative_slope * y)


if __name__ == "__main__":
    key = jax.random.PRNGKey(0)
    k_x, k_p = jax.random.split(key)

    # ConvBlock(in_size=4, out_size=8), default normalize=None, LeakyReLU(0.2)
    N, Cin, H, W = 2, 4, 16, 16
    Cout = 8

    x = jax.random.normal(k_x, (N, Cin, H, W), dtype=jnp.float32)
    weight, bias = init_params(k_p, Cin, Cout, kernel_size=4)

    # Exact-precision path (f32 MXU inputs).
    out_f32 = jax.block_until_ready(
        conv_block_pallas(x, weight, bias, compute_dtype=jnp.float32))
    # Default fast path (bf16 MXU inputs, f32 accumulation).
    out_bf16 = jax.block_until_ready(conv_block_pallas(x, weight, bias))

    ref = conv_block_reference(x, weight, bias)
    assert out_f32.shape == (N, Cout, H // 2, W // 2), out_f32.shape
    assert jnp.allclose(out_f32, ref, atol=1e-4, rtol=1e-4), \
        float(jnp.max(jnp.abs(out_f32 - ref)))
    assert jnp.allclose(out_bf16, ref, atol=1e-1, rtol=1e-1), \
        float(jnp.max(jnp.abs(out_bf16 - ref)))

    print("KERNEL_OK")
</pallas_src>

<mosaic_0001>
module attributes {stable_mosaic.version = 11 : i64} {
  func.func @_conv_gemm_kernel(%arg0: i32, %arg1: i32, %arg2: memref<1x64x64xf32, #tpu.memory_space<vmem>>, %arg3: memref<64x8xf32, #tpu.memory_space<vmem>>, %arg4: memref<1x8xf32, #tpu.memory_space<vmem>>, %arg5: memref<1x8x64xf32, #tpu.memory_space<vmem>>) attributes {dimension_semantics = [#tpu.dimension_semantics<parallel>, #tpu.dimension_semantics<parallel>], iteration_bounds = array<i64: 2, 1>, scalar_prefetch = 0 : i64, scratch_operands = 0 : i64, tpu.core_type = #tpu.core_type<tc>, window_params = [{transform_indices = @transform_0, window_bounds = array<i64: 1, 64, 64>}, {pipeline_mode = #tpu.pipeline_mode<synchronous>, transform_indices = @transform_1, window_bounds = array<i64: 64, 8>}, {pipeline_mode = #tpu.pipeline_mode<synchronous>, transform_indices = @transform_2, window_bounds = array<i64: 1, 8>}, {transform_indices = @transform_3, window_bounds = array<i64: 1, 8, 64>}]} {
    %c0 = arith.constant 0 : index
    %c0_0 = arith.constant 0 : index
    %c0_1 = arith.constant 0 : index
    %0 = vector.load %arg2[%c0, %c0_0, %c0_1] : memref<1x64x64xf32, #tpu.memory_space<vmem>>, vector<1x64x64xf32>
    %1 = vector.shape_cast %0 : vector<1x64x64xf32> to vector<64x64xf32>
    %c0_2 = arith.constant 0 : index
    %c0_3 = arith.constant 0 : index
    %2 = vector.load %arg3[%c0_2, %c0_3] : memref<64x8xf32, #tpu.memory_space<vmem>>, vector<64x8xf32>
    %cst = arith.constant dense<0.000000e+00> : vector<64x8xf32>
    %3 = tpu.matmul %1, %2, %cst {dimension_numbers = #tpu.dot_dimension_numbers<[1], [0], [0], [1], [0, 0, 1, 1], [], []>} : vector<64x64xf32>, vector<64x8xf32>, vector<64x8xf32> -> vector<64x8xf32>
    %c0_4 = arith.constant 0 : index
    %c0_5 = arith.constant 0 : index
    %4 = vector.load %arg4[%c0_4, %c0_5] : memref<1x8xf32, #tpu.memory_space<vmem>>, vector<1x8xf32>
    %5 = vector.broadcast %4 : vector<1x8xf32> to vector<64x8xf32>
    %6 = arith.addf %3, %5 : vector<64x8xf32>
    %cst_6 = arith.constant 0.000000e+00 : f32
    %7 = vector.broadcast %cst_6 : f32 to vector<64x8xf32>
    %8 = arith.cmpf ogt, %6, %7 : vector<64x8xf32>
    %cst_7 = arith.constant 2.000000e-01 : f32
    %9 = vector.broadcast %cst_7 : f32 to vector<64x8xf32>
    %10 = arith.mulf %9, %6 : vector<64x8xf32>
    %11 = arith.select %8, %6, %10 : vector<64x8xi1>, vector<64x8xf32>
    %12 = tpu.transpose %11, [1, 0] : vector<64x8xf32> -> vector<8x64xf32>
    %c0_8 = arith.constant 0 : index
    %c0_9 = arith.constant 0 : index
    %c0_10 = arith.constant 0 : index
    %13 = vector.load %arg5[%c0_8, %c0_9, %c0_10] : memref<1x8x64xf32, #tpu.memory_space<vmem>>, vector<1x8x64xf32>
    %14 = vector.shape_cast %13 : vector<1x8x64xf32> to vector<8x64xf32>
    %15 = vector.shape_cast %12 : vector<8x64xf32> to vector<1x8x64xf32>
    tpu.vector_store %arg5[%c0_8, %c0_9, %c0_10], %15 {strides = array<i32>} : memref<1x8x64xf32, #tpu.memory_space<vmem>>, vector<1x8x64xf32>,
    return
  }
  func.func @transform_0(%arg0: i32, %arg1: i32) -> (i32, i32, i32) {
    %c0_i32 = arith.constant 0 : i32
    %c0_i32_0 = arith.constant 0 : i32
    return %arg0, %arg1, %c0_i32 : i32, i32, i32
  }
  func.func @transform_1(%arg0: i32, %arg1: i32) -> (i32, i32) {
    %c0_i32 = arith.constant 0 : i32
    %c0_i32_0 = arith.constant 0 : i32
    %c0_i32_1 = arith.constant 0 : i32
    return %c0_i32, %c0_i32_0 : i32, i32
  }
  func.func @transform_2(%arg0: i32, %arg1: i32) -> (i32, i32) {
    %c0_i32 = arith.constant 0 : i32
    %c0_i32_0 = arith.constant 0 : i32
    %c0_i32_1 = arith.constant 0 : i32
    return %c0_i32, %c0_i32_0 : i32, i32
  }
  func.func @transform_3(%arg0: i32, %arg1: i32) -> (i32, i32, i32) {
    %c0_i32 = arith.constant 0 : i32
    %c0_i32_0 = arith.constant 0 : i32
    return %arg0, %c0_i32, %arg1 : i32, i32, i32
  }
}

</mosaic_0001>

<llo_original>
// kernel: tpu_custom_call.1
$region0: #{tpu_custom_call.1}
  #allocation0 [shape = 'u32[]', space=smem, size = 0x4, offset = 0x4, fixed_abs, tag = 'smem constant byte address 0x4 - core index']
  #allocation1 [shape = 'u32[72,128]{1,0:T(1,128)}', space=vmem, size = 0x9000, scoped, tag = 'internal scratch']
  %s0 = inlined_call_operand.hbm [shape: f32[2,64,64], index: 0, kind: input, shape index: {}]
  %s1 = inlined_call_operand.vmem [shape: f32[64,8], index: 1, kind: input, shape index: {}]
  %s2 = inlined_call_operand.vmem [shape: f32[1,8], index: 2, kind: input, shape index: {}]
  %s3 = inlined_call_operand.hbm [shape: f32[2,8,64], index: 3, kind: output, shape index: {}]
  %s4 = sld [smem:[#allocation0]]
  $region49: #{tpu_custom_call.1} parent=0
    _
  %s6 = ssub.s32 1, %s4
  %s7 = scalar_select 0, %s6, %s4
  $region1: #{tpu_custom_call.1} parent=0
    #allocation2 [shape = 'u8[65536]{0}', space=vmem, size = 0x10000, scoped, tag = 'input window, operand 0']
    #allocation3 [shape = 's32[2]{0}', space=sflag, size = 0x8, scoped, tag = 'scoped memory for tpu_custom_call.1']
    #allocation4 [shape = 's32[2]{0}', space=sflag, size = 0x8, scoped, tag = 'scoped memory for tpu_custom_call.1']
    #allocation5 [shape = 'u8[8192]{0}', space=vmem, size = 0x2000, scoped, tag = 'output window, operand 0']
    %8 = vsyncpa [#allocation3], 0
    %s9 = scalar_lea.sflag [#allocation3], 1
    %10 = vsyncpa %s9, 0
    %11 = vsyncpa [#allocation4], 0
    %s12 = scalar_lea.sflag [#allocation4], 1
    %13 = vsyncpa %s12, 0
    loop: start=0, step=1, limit=4
    $region2: #{tpu_custom_call.1} parent=1 // loop_pre_header
      _
    $region3: #{tpu_custom_call.1} parent=1 // loop_header
      %s15 = sphi 0, %s19
      %p16 = scmp.ge.s32.totalorder %s15, 4
      %s22 = sphi 0, %s34
      %s23 = sphi 0, %s30
      %s24 = sphi 0, %s22
      %s25 = sphi 0, %s23
      %s26 = sphi 0, %s24
      %s27 = sphi 0, %s25
      %s39 = sphi 0, %s41
      %s42 = sphi 0, %s39
      %s43 = sphi 0, %s42
      %s59 = sphi 0, %s43
      %s63 = sphi 0, %s63
      %s65 = sphi 0, %s63
      %s66 = sphi 0, %s65
      %s80 = sphi 0, %s66
      %s84 = sphi 0, %s84
      %s86 = sphi 0, %s84
      %s87 = sphi 0, %s86
      %s101 = sphi 0, %s87
      %s109 = sphi 0, %s111
      %s112 = sphi 0, %s109
      %s113 = sphi 0, %s112
      %s129 = sphi 0, %s113
    $region4: #{tpu_custom_call.1} parent=1 // loop_header_branch
      %18 = sbr.rel (%p16) target = $region8
    $region5: #{tpu_custom_call.1} parent=1 // loop_body
      %s20 = ssub.s32 %s15, 1
      %s21 = ssub.s32 %s15, 2
      %s28 = sadd.s32 1, %s23
      %p29 = scmp.ge.s32.totalorder %s28, 1
      %s30 = scalar_select %p29, 0, %s28
      %s31 = sadd.s32 1, %s22
      %s32 = scalar_select %p29, %s31, %s22
      %p33 = scmp.ge.s32.totalorder %s32, 2
      %s34 = scalar_select %p33, 0, %s32
      %s35 = ssub.s32 %s22, %s34
      %s36 = ssub.s32 %s23, %s30
      %s37 = sor.u32 %s35, %s36
      %p38 = scmp.eq.s32.totalorder %s37, 0
      %s40 = sadd.s32 %s39, 1
      %s41 = scalar_select %p38, %s39, %s40
      %p44 = pneg %p38
      %p45 = scmp.eq.s32.totalorder %s15, 1
      %p46 = por %p44, %p45
      %p47 = scmp.ne.s32.totalorder %s39, %s42
      %p48 = scmp.eq.s32.totalorder %s15, 0
      %p49 = por %p47, %p48
      %p50 = scmp.ne.s32.totalorder %s39, %s42
      %p51 = scmp.eq.s32.totalorder %s20, 1
      %p52 = por %p50, %p51
      %p53 = scmp.ne.s32.totalorder %s42, %s43
      %p54 = scmp.eq.s32.totalorder %s20, 0
      %p55 = por %p53, %p54
      %p56 = scmp.ne.s32.totalorder %s42, %s43
      %p57 = scmp.eq.s32.totalorder %s21, 1
      %p58 = por %p56, %p57
      %p60 = scmp.ne.s32.totalorder %s43, %s59
      %p61 = scmp.eq.s32.totalorder %s21, 0
      %p62 = por %p60, %p61
      %s64 = sadd.s32 %s63, 1
      %p67 = scmp.eq.s32.totalorder %s15, 1
      %p68 = scmp.ne.s32.totalorder %s63, %s65
      %p69 = scmp.eq.s32.totalorder %s15, 0
      %p70 = por %p68, %p69
      %p71 = scmp.ne.s32.totalorder %s63, %s65
      %p72 = scmp.eq.s32.totalorder %s20, 1
      %p73 = por %p71, %p72
      %p74 = scmp.ne.s32.totalorder %s65, %s66
      %p75 = scmp.eq.s32.totalorder %s20, 0
      %p76 = por %p74, %p75
      %p77 = scmp.ne.s32.totalorder %s65, %s66
      %p78 = scmp.eq.s32.totalorder %s21, 1
      %p79 = por %p77, %p78
      %p81 = scmp.ne.s32.totalorder %s66, %s80
      %p82 = scmp.eq.s32.totalorder %s21, 0
      %p83 = por %p81, %p82
      %s85 = sadd.s32 %s84, 1
      %p88 = scmp.eq.s32.totalorder %s15, 1
      %p89 = scmp.ne.s32.totalorder %s84, %s86
      %p90 = scmp.eq.s32.totalorder %s15, 0
      %p91 = por %p89, %p90
      %p92 = scmp.ne.s32.totalorder %s84, %s86
      %p93 = scmp.eq.s32.totalorder %s20, 1
      %p94 = por %p92, %p93
      %p95 = scmp.ne.s32.totalorder %s86, %s87
      %p96 = scmp.eq.s32.totalorder %s20, 0
      %p97 = por %p95, %p96
      %p98 = scmp.ne.s32.totalorder %s86, %s87
      %p99 = scmp.eq.s32.totalorder %s21, 1
      %p100 = por %p98, %p99
      %p102 = scmp.ne.s32.totalorder %s87, %s101
      %p103 = scmp.eq.s32.totalorder %s21, 0
      %p104 = por %p102, %p103
      %s105 = ssub.s32 %s22, %s34
      %s106 = ssub.s32 %s23, %s30
      %s107 = sor.u32 %s105, %s106
      %p108 = scmp.eq.s32.totalorder %s107, 0
      %s110 = sadd.s32 %s109, 1
      %s111 = scalar_select %p108, %s109, %s110
      %p114 = pneg %p108
      %p115 = scmp.eq.s32.totalorder %s15, 1
      %p116 = por %p114, %p115
      %p117 = scmp.ne.s32.totalorder %s109, %s112
      %p118 = scmp.eq.s32.totalorder %s15, 0
      %p119 = por %p117, %p118
      %p120 = scmp.ne.s32.totalorder %s109, %s112
      %p121 = scmp.eq.s32.totalorder %s20, 1
      %p122 = por %p120, %p121
      %p123 = scmp.ne.s32.totalorder %s112, %s113
      %p124 = scmp.eq.s32.totalorder %s20, 0
      %p125 = por %p123, %p124
      %p126 = scmp.ne.s32.totalorder %s112, %s113
      %p127 = scmp.eq.s32.totalorder %s21, 1
      %p128 = por %p126, %p127
      %p130 = scmp.ne.s32.totalorder %s113, %s129
      %p131 = scmp.eq.s32.totalorder %s21, 0
      %p132 = por %p130, %p131
      %p133 = scmp.le.s32.totalorder 1, %s15
      %p134 = scmp.lt.s32.totalorder %s15, 3
      %p135 = pnand %p133, %p134
      %p136 = pneg %p135
      // Predicated region
      $region9: #{tpu_custom_call.1} parent=5 // pred_check
        _
      $region10: #{tpu_custom_call.1} parent=5 // pred_check_branch
        %138 = sbr.rel (%p135) target = $region12
      $region11: #{tpu_custom_call.1} parent=5 // pred_region
        %s139 = ssub.s32 %s15, 1
        // Predicated region
        $region13: #{tpu_custom_call.1} parent=11 // pred_check
          %p140 = pneg %p76
        $region14: #{tpu_custom_call.1} parent=11 // pred_check_branch
          %142 = sbr.rel (%p140) target = $region16
        $region15: #{tpu_custom_call.1} parent=11 // pred_region
          _
        $region16: #{tpu_custom_call.1} parent=11 // pred_fallthru
          _
        // Predicated region
        $region17: #{tpu_custom_call.1} parent=11 // pred_check
          %p143 = pneg %p97
        $region18: #{tpu_custom_call.1} parent=11 // pred_check_branch
          %145 = sbr.rel (%p143) target = $region20
        $region19: #{tpu_custom_call.1} parent=11 // pred_region
          _
        $region20: #{tpu_custom_call.1} parent=11 // pred_fallthru
          _
      $region12: #{tpu_custom_call.1} parent=5 // pred_fallthru
        _
      %p146 = scmp.lt.s32.totalorder %s15, 2
      // Predicated region
      $region21: #{tpu_custom_call.1} parent=5 // pred_check
        %p147 = pneg %p146
      $region22: #{tpu_custom_call.1} parent=5 // pred_check_branch
        %149 = sbr.rel (%p147) target = $region24
      $region23: #{tpu_custom_call.1} parent=5 // pred_region
        // Predicated region
        $region25: #{tpu_custom_call.1} parent=23 // pred_check
          %p150 = pneg %p49
        $region26: #{tpu_custom_call.1} parent=23 // pred_check_branch
          %152 = sbr.rel (%p150) target = $region28
        $region27: #{tpu_custom_call.1} parent=23 // pred_region
          %s153 = sand.u32 %s39, 1
          %s154 = scalar_lea.sflag [#allocation3], %s153
          %s155 = sand.u32 %s39, 1
          %s156 = smul.addr %s155, 64
          %s157 = scalar_lea.vmem [#allocation2], %s156
          %s158 = smul.u32 8, %s23
          %160 = vsyncadd %s154, 0
          %s161 = smul.addr %s22, 8
          %s162 = sadd.s32 %s158, %s161
          %s163 = smul.addr %s162, 8
          %s164 = scalar_lea.hbm %s0, %s163
          %s165 = sshll.u32 %s164, 4
          %s166 = int_to_ptr.hbm [resolvable:$true] %s165
          %s167 = sshll.u32 %s157, 4
          %s168 = int_to_ptr.vmem [resolvable:$true] %s167
          %173 = dma.hbm_to_vmem [thread:$0]  %s166, 1024, %s168, %s154, 128, 128, 8
        $region28: #{tpu_custom_call.1} parent=23 // pred_fallthru
          _
      $region24: #{tpu_custom_call.1} parent=5 // pred_fallthru
        _
      %p174 = scmp.le.s32.totalorder 1, %s15
      %p175 = scmp.lt.s32.totalorder %s15, 3
      %p176 = pnand %p174, %p175
      %p177 = pneg %p176
      // Predicated region
      $region29: #{tpu_custom_call.1} parent=5 // pred_check
        _
      $region30: #{tpu_custom_call.1} parent=5 // pred_check_branch
        %179 = sbr.rel (%p176) target = $region32
      $region31: #{tpu_custom_call.1} parent=5 // pred_region
        %s180 = ssub.s32 %s15, 1
        %s181 = sand.u32 %s42, 1
        %s182 = scalar_lea.sflag [#allocation3], %s181
        %s183 = sand.u32 %s42, 1
        %s184 = smul.addr %s183, 64
        %s185 = scalar_lea.vmem [#allocation2], %s184
        // Predicated region
        $region33: #{tpu_custom_call.1} parent=31 // pred_check
          %p186 = pneg %p55
        $region34: #{tpu_custom_call.1} parent=31 // pred_check_branch
          %188 = sbr.rel (%p186) target = $region36
        $region35: #{tpu_custom_call.1} parent=31 // pred_region
          %190 = dma.done %s182, 1024
        $region36: #{tpu_custom_call.1} parent=31 // pred_fallthru
          _
        %s191 = sand.u32 %s42, 1
        %s192 = scalar_lea.sflag [#allocation3], %s191
        %s193 = sand.u32 %s42, 1
        %s194 = smul.addr %s193, 64
        %s195 = scalar_lea.vmem [#allocation2], %s194
        %p196 = pneg %p55
        %p197 = pneg %p52
        %p198 = pneg %p76
        %p199 = pneg %p73
        %p200 = pneg %p97
        %p201 = pneg %p94
        %p202 = pneg %p125
        %p203 = pneg %p122
        %s204 = sand.u32 %s112, 1
        %s205 = scalar_lea.sflag [#allocation4], %s204
        %s206 = sand.u32 %s112, 1
        %s207 = smul.addr %s206, 8
        %s208 = scalar_lea.vmem [#allocation5], %s207
        %s209 = smul.u32 8, %s25
        %v210 = vld [vmem:[%s185] sm:$0xff]
        %v211 = vld [vmem:[%s185 + $0x8] sm:$0xff]
        %v212 = vld [vmem:[%s185 + $0x10] sm:$0xff]
        %v213 = vld [vmem:[%s185 + $0x18] sm:$0xff]
        %v214 = vld [vmem:[%s185 + $0x20] sm:$0xff]
        %v215 = vld [vmem:[%s185 + $0x28] sm:$0xff]
        %v216 = vld [vmem:[%s185 + $0x30] sm:$0xff]
        %v217 = vld [vmem:[%s185 + $0x38] sm:$0xff]
        %v218 = vld [vmem:[%s1] sm:$0xff]
        %v219 = vld [vmem:[%s1 + $0x8] sm:$0xff]
        %v220 = vld [vmem:[%s1 + $0x10] sm:$0xff]
        %v221 = vld [vmem:[%s1 + $0x18] sm:$0xff]
        %v222 = vld [vmem:[%s1 + $0x20] sm:$0xff]
        %v223 = vld [vmem:[%s1 + $0x28] sm:$0xff]
        %v224 = vld [vmem:[%s1 + $0x30] sm:$0xff]
        %v225 = vld [vmem:[%s1 + $0x38] sm:$0xff]
        %v226 = vld [vmem:[%s2] sm:$0x1]
        %v228 = vperm.slane %v226, 0
        %vm230 = vcmask 523264
        %v232 = vsel %vm230, %v210, 0
        %v235 = vsel %vm230, %v211, 0
        %v238 = vsel %vm230, %v212, 0
        %v241 = vsel %vm230, %v213, 0
        %v244 = vsel %vm230, %v214, 0
        %v247 = vsel %vm230, %v215, 0
        %v250 = vsel %vm230, %v216, 0
        %v253 = vsel %vm230, %v217, 0
        %255 = vmatpush.msra.mxu0 0.0
        %256 = vmatpush.msra.mxu0 0.0
        %257 = vmatpush.msra.mxu0 0.0
        %258 = vmatpush.msra.mxu0 0.0
        %259 = vmatpush.msra.mxu0 0.0
        %260 = vmatpush.msra.mxu0 0.0
        %261 = vmatpush.msra.mxu0 0.0
        %262 = vmatpush.msra.mxu0 0.0
        %263 = vmatpush.msra.mxu0 %v225
        %264 = vmatpush.msra.mxu0 %v224
        %265 = vmatpush.msra.mxu0 %v223
        %266 = vmatpush.msra.mxu0 %v222
        %267 = vmatpush.msra.mxu0 %v221
        %268 = vmatpush.msra.mxu0 %v220
        %269 = vmatpush.msra.mxu0 %v219
        %270 = vmatpush.msra.mxu0 %v218
        %271 = vmatmul.f32.gmra.mxu0 %v232
        %v272 = vpop.f32.mrf.mxu0
        %v273 = vadd.f32 %v228, %v272
        %274 = vmatmul.f32.gmra.mxu0 %v235
        %v275 = vpop.f32.mrf.mxu0
        %v276 = vadd.f32 %v228, %v275
        %277 = vmatmul.f32.gmra.mxu0 %v238
        %v278 = vpop.f32.mrf.mxu0
        %v279 = vadd.f32 %v228, %v278
        %280 = vmatmul.f32.gmra.mxu0 %v241
        %v281 = vpop.f32.mrf.mxu0
        %v282 = vadd.f32 %v228, %v281
        %283 = vmatmul.f32.gmra.mxu0 %v244
        %v284 = vpop.f32.mrf.mxu0
        %v285 = vadd.f32 %v228, %v284
        %286 = vmatmul.f32.gmra.mxu0 %v247
        %v287 = vpop.f32.mrf.mxu0
        %v288 = vadd.f32 %v228, %v287
        %289 = vmatmul.f32.gmra.mxu0 %v250
        %v290 = vpop.f32.mrf.mxu0
        %v291 = vadd.f32 %v228, %v290
        %292 = vmatmul.f32.gmra.mxu0 %v253
        %v293 = vpop.f32.mrf.mxu0
        %v294 = vadd.f32 %v228, %v293
        %295 = vdwg.mxu0
        %vm296 = vcmp.gt.f32.partialorder %v273, 0.0
        %vm297 = vcmp.gt.f32.partialorder %v276, 0.0
        %vm298 = vcmp.gt.f32.partialorder %v279, 0.0
        %vm299 = vcmp.gt.f32.partialorder %v282, 0.0
        %vm300 = vcmp.gt.f32.partialorder %v285, 0.0
        %vm301 = vcmp.gt.f32.partialorder %v288, 0.0
        %vm302 = vcmp.gt.f32.partialorder %v291, 0.0
        %vm303 = vcmp.gt.f32.partialorder %v294, 0.0
        %v304 = vmul.f32 %v273, 0.2
        %v305 = vmul.f32 %v276, 0.2
        %v306 = vmul.f32 %v279, 0.2
        %v307 = vmul.f32 %v282, 0.2
        %v308 = vmul.f32 %v285, 0.2
        %v309 = vmul.f32 %v288, 0.2
        %v310 = vmul.f32 %v291, 0.2
        %v311 = vmul.f32 %v294, 0.2
        %v312 = vsel %vm296, %v273, %v304
        %v313 = vsel %vm297, %v276, %v305
        %v314 = vsel %vm298, %v279, %v306
        %v315 = vsel %vm299, %v282, %v307
        %v316 = vsel %vm300, %v285, %v308
        %v317 = vsel %vm301, %v288, %v309
        %v318 = vsel %vm302, %v291, %v310
        %v319 = vsel %vm303, %v294, %v311
        %320 = vxpose.xlu0.b32.start [1/16] %v312, 128
        %321 = vxpose.xlu0.b32.cont [2/16] %v313, 128
        %322 = vxpose.xlu0.b32.cont [3/16] %v314, 128
        %323 = vxpose.xlu0.b32.cont [4/16] %v315, 128
        %324 = vxpose.xlu0.b32.cont [5/16] %v316, 128
        %325 = vxpose.xlu0.b32.cont [6/16] %v317, 128
        %326 = vxpose.xlu0.b32.cont [7/16] %v318, 128
        %327 = vxpose.xlu0.b32.cont [8/16] %v319, 128
        %328 = vxpose.xlu0.b32.cont [9/16] 0.0, 128
        %329 = vxpose.xlu0.b32.cont [10/16] 0.0, 128
        %330 = vxpose.xlu0.b32.cont [11/16] 0.0, 128
        %331 = vxpose.xlu0.b32.cont [12/16] 0.0, 128
        %332 = vxpose.xlu0.b32.cont [13/16] 0.0, 128
        %333 = vxpose.xlu0.b32.cont [14/16] 0.0, 128
        %334 = vxpose.xlu0.b32.cont [15/16] 0.0, 128
        %335 = vxpose.xlu0.b32.end [16/16] 0.0, 128
        %v336 = vpop.trf.xlu0
        %v337 = vpop.trf.xlu0
        %v338 = vpop.trf.xlu0
        %v339 = vpop.trf.xlu0
        %v340 = vpop.trf.xlu0
        %v341 = vpop.trf.xlu0
        %v342 = vpop.trf.xlu0
        %v343 = vpop.trf.xlu0
        %v344 = vpop.trf.xlu0
        %v345 = vpop.trf.xlu0
        %v346 = vpop.trf.xlu0
        %v347 = vpop.trf.xlu0
        %v348 = vpop.trf.xlu0
        %v349 = vpop.trf.xlu0
        %v350 = vpop.trf.xlu0
        %v351 = vpop.trf.xlu0
        %352 = vst.msk [vmem:[%s208] sm:$0xff] %vm230, %v336
        %s353 = sand.u32 %s112, 1
        %s354 = scalar_lea.sflag [#allocation4], %s353
        %s355 = sand.u32 %s112, 1
        %s356 = smul.addr %s355, 8
        %s357 = scalar_lea.vmem [#allocation5], %s356
        // Predicated region
        $region37: #{tpu_custom_call.1} parent=31 // pred_check
          %p358 = pneg %p122
        $region38: #{tpu_custom_call.1} parent=31 // pred_check_branch
          %360 = sbr.rel (%p358) target = $region40
        $region39: #{tpu_custom_call.1} parent=31 // pred_region
          %362 = vsyncadd %s354, 0
          %s363 = sadd.s32 %s25, %s24
          %s364 = smul.addr %s363, 8
          %s365 = scalar_lea.hbm %s3, %s364
          %s367 = sshll.u32 %s357, 4
          %s368 = int_to_ptr.vmem [resolvable:$true] %s367
          %s369 = sshll.u32 %s365, 4
          %s370 = int_to_ptr.hbm [resolvable:$true] %s369
          %372 = dma.vmem_to_hbm [thread:$0]  %s368, 128, %s370, %s354
        $region40: #{tpu_custom_call.1} parent=31 // pred_fallthru
          _
      $region32: #{tpu_custom_call.1} parent=5 // pred_fallthru
        _
      %p373 = scmp.le.s32.totalorder 2, %s15
      // Predicated region
      $region41: #{tpu_custom_call.1} parent=5 // pred_check
        %p374 = pneg %p373
      $region42: #{tpu_custom_call.1} parent=5 // pred_check_branch
        %376 = sbr.rel (%p374) target = $region44
      $region43: #{tpu_custom_call.1} parent=5 // pred_region
        %s377 = ssub.s32 %s15, 2
        // Predicated region
        $region45: #{tpu_custom_call.1} parent=43 // pred_check
          %p378 = pneg %p128
        $region46: #{tpu_custom_call.1} parent=43 // pred_check_branch
          %380 = sbr.rel (%p378) target = $region48
        $region47: #{tpu_custom_call.1} parent=43 // pred_region
          %s381 = sand.u32 %s113, 1
          %s382 = scalar_lea.sflag [#allocation4], %s381
          %s383 = sand.u32 %s113, 1
          %s384 = smul.addr %s383, 8
          %s385 = scalar_lea.vmem [#allocation5], %s384
          %387 = dma.done %s382, 128
        $region48: #{tpu_custom_call.1} parent=43 // pred_fallthru
          _
      $region44: #{tpu_custom_call.1} parent=5 // pred_fallthru
        _
    $region6: #{tpu_custom_call.1} parent=1 // loop_footer
      %s19 = sadd.s32 1, %s15
    $region7: #{tpu_custom_call.1} parent=1 // loop_footer_branch
      %14 = sbr.rel target = $region3
    $region8: #{tpu_custom_call.1} parent=1 // loop_exit
      _
    %388 = vsyncpa [#allocation3], 1
    %s389 = scalar_lea.sflag [#allocation3], 1
    %390 = vsyncpa %s389, 1
    %391 = vsyncpa [#allocation4], 1
    %s392 = scalar_lea.sflag [#allocation4], 1
    %393 = vsyncpa %s392, 1

</llo_original>
